<compile_context>
chip_gen: v7x
topology: tpu7x:2x2x1
jax: 0.10.0
libtpu: 0.0.40
codegen_flags: <defaults>
</compile_context>

<pallas_src>
import functools

import jax
import jax.numpy as jnp
from jax.experimental import pallas as pl
from jax.experimental.pallas import tpu as pltpu

MED_FRQ = [0.3829, 0.452448, 0.637584, 0.377464, 0.585595, 0.479574, 0.781544,
           0.982534, 1.017466, 0.624581, 2.589096, 0.980794, 0.92034, 0.667984,
           1.172291, 0.86224, 0.921714, 2.154782, 1.187832, 1.178115, 1.848545,
           1.428922, 2.849658, 0.771605, 1.656668, 4.483506, 2.209922, 1.12028,
           2.790182, 0.706519, 3.994768, 2.220004, 0.972934, 1.481525, 5.342475,
           0.750738, 4.040773]


def _weighted_ce_kernel(hw, x_ref, t_ref, wpx_ref, loss_ref, cnt_ref):
    # x_ref:    (1, C, TP)   logits block (classes on sublanes, pixels on lanes)
    # t_ref:    (1, 1, TP)   int32 raw labels (0 = unlabeled, 1..C = class id + 1)
    # wpx_ref:  (1, 1, TP)   f32 per-pixel class weight, already 0 where unlabeled
    # loss_ref: (1, 1, 1, 1) f32 partial sum of weighted loss for this block
    # cnt_ref:  (1, 1, 1, 1) f32 partial count of labeled pixels in this block
    x = x_ref[0].astype(jnp.float32)                   # (C, TP), in-register upcast
    t = t_ref[0]                                       # (1, TP) int32
    wpx = wpx_ref[0]                                   # (1, TP) f32
    tp = x.shape[1]

    # Numerically-stable log-sum-exp over the class (sublane) axis.
    m = jnp.max(x, axis=0, keepdims=True)              # (1, TP)
    lse = jnp.log(jnp.sum(jnp.exp(x - m), axis=0, keepdims=True)) + m

    # One-hot pick of the target logit (no dynamic gather on TPU).  For
    # unlabeled pixels (t == 0) the one-hot is all-False -> x_t == 0 and the
    # loss is killed by wpx == 0, so no extra where is needed.
    cls = jax.lax.broadcasted_iota(jnp.int32, x.shape, 0)        # (C, TP)
    x_t = jnp.sum(jnp.where(cls == (t - 1), x, 0.0), axis=0, keepdims=True)

    loss = wpx * (lse - x_t)                            # (1, TP)
    valid = (t > 0).astype(jnp.float32)                 # (1, TP)

    if hw % tp != 0:
        # Ragged last tile: lanes past HW hold unspecified data -> mask them.
        lane = jax.lax.broadcasted_iota(jnp.int32, (1, tp), 1)
        in_bounds = (pl.program_id(1) * tp + lane) < hw
        loss = jnp.where(in_bounds, loss, 0.0)
        valid = jnp.where(in_bounds, valid, 0.0)

    loss_ref[0, 0] = jnp.sum(loss, axis=1, keepdims=True)        # (1, 1)
    cnt_ref[0, 0] = jnp.sum(valid, axis=1, keepdims=True)        # (1, 1)


def cross_entropy_loss_2d(inputs, targets, weight, *, tile_p=8192):
    """inputs: (N, C, H, W) logits (any float dtype; bf16 halves the dominant
    HBM stream); targets: (N, H, W) int labels in [0, C] (0 == unlabeled);
    weight: (C,) per-class weights.  Returns the scalar masked weighted mean.

    Notes: if no pixel is labeled the result is 0/0 == NaN, matching the
    PyTorch module.  Labels > C are out of range (PyTorch would raise); here
    they produce a clamped-weight loss value — undefined behavior either way.
    """
    N, C, H, W = inputs.shape
    HW = H * W

    x = inputs.reshape(N, C, HW)                        # free reshape of NCHW, keep dtype
    t32 = targets.astype(jnp.int32)
    t = t32.reshape(N, 1, HW)

    # Per-pixel class weight with the unlabeled mask folded in (tiny XLA
    # gather over the labels).  Removes the second one-hot pass, the weight
    # lane-broadcast and the final mask-where from the kernel's VPU/XLU budget.
    w_arr = jnp.asarray(weight, jnp.float32)
    valid = t32 > 0
    w_px = jnp.where(valid, w_arr[jnp.where(valid, t32 - 1, 0)], 0.0)
    w_px = w_px.reshape(N, 1, HW).astype(jnp.float32)

    # Pixel tile: lane-dense multiple of 128, as large as sensible; full
    # extent when HW already fits in one tile.
    if HW <= tile_p:
        tile = HW
    else:
        tile = max(128, (tile_p // 128) * 128)
    num_tiles = pl.cdiv(HW, tile)
    # v7x has 2 TensorCores: keep at least 2 parallel grid steps when possible.
    if N * num_tiles < 2 and HW >= 256:
        tile = pl.cdiv(pl.cdiv(HW, 2), 128) * 128
        num_tiles = pl.cdiv(HW, tile)

    compiler_kwargs = {}
    itemsize = jnp.dtype(x.dtype).itemsize
    block_bytes = tile * (C * itemsize + 4 + 4)         # logits + labels + w_px blocks
    if 2 * block_bytes > 12 * 1024 * 1024:              # beyond v5e's default scoped VMEM
        compiler_kwargs["vmem_limit_bytes"] = int(
            min(4 * block_bytes + (8 << 20), 120 << 20))

    cost = pl.CostEstimate(
        flops=6 * N * HW * C,
        transcendentals=N * HW * (C + 1),
        bytes_accessed=int(x.size * itemsize + t.size * 4 + w_px.size * 4
                           + 2 * N * num_tiles * 4),
    )

    kernel = functools.partial(_weighted_ce_kernel, HW)
    loss_sums, counts = pl.pallas_call(
        kernel,
        out_shape=(
            jax.ShapeDtypeStruct((N, num_tiles, 1, 1), jnp.float32),
            jax.ShapeDtypeStruct((N, num_tiles, 1, 1), jnp.float32),
        ),
        grid_spec=pltpu.PrefetchScalarGridSpec(
            num_scalar_prefetch=0,
            grid=(N, num_tiles),
            in_specs=[
                pl.BlockSpec((1, C, tile), lambda n, p: (n, 0, p)),   # logits
                pl.BlockSpec((1, 1, tile), lambda n, p: (n, 0, p)),   # labels
                pl.BlockSpec((1, 1, tile), lambda n, p: (n, 0, p)),   # per-pixel weight
            ],
            out_specs=[
                pl.BlockSpec((1, 1, 1, 1), lambda n, p: (n, p, 0, 0)),
                pl.BlockSpec((1, 1, 1, 1), lambda n, p: (n, p, 0, 0)),
            ],
        ),
        compiler_params=pltpu.CompilerParams(
            dimension_semantics=("parallel", "parallel"), **compiler_kwargs),
        cost_estimate=cost,
    )(x, t, w_px)

    # Tiny scalar epilogue (matches torch: sum(loss[mask]) / sum(mask)).
    return jnp.sum(loss_sums) / jnp.sum(counts)


def _reference(inputs, targets, weight):
    # pure-JAX reference of the PyTorch module's forward pass
    mask = targets > 0
    tm = jnp.where(mask, targets - 1, 0).astype(jnp.int32)
    logp = jax.nn.log_softmax(inputs.astype(jnp.float32), axis=1)   # (N,C,H,W)
    picked = jnp.take_along_axis(logp, tm[:, None, :, :], axis=1)[:, 0]
    w = jnp.asarray(weight, jnp.float32)
    loss = -picked * w[tm]
    return jnp.sum(jnp.where(mask, loss, 0.0)) / jnp.sum(mask.astype(jnp.float32))


if __name__ == "__main__":
    key = jax.random.PRNGKey(0)
    weight = jnp.asarray(MED_FRQ, jnp.float32)
    C = weight.shape[0]                 # 37 classes
    k1, k2, k3, k4 = jax.random.split(key, 4)

    # Main check: default configuration (single full-extent pixel tile).
    N, H, W = 2, 16, 16
    inputs = jax.random.normal(k1, (N, C, H, W), dtype=jnp.float32)
    # labels in [0, C]: 0 == unlabeled (masked out), 1..C == class id + 1
    targets = jax.random.randint(k2, (N, H, W), 0, C + 1, dtype=jnp.int32)

    loss = jax.block_until_ready(cross_entropy_loss_2d(inputs, targets, weight))
    ref = _reference(inputs, targets, weight)
    assert loss.shape == ()
    assert jnp.allclose(loss, ref, atol=1e-4, rtol=1e-4), (float(loss), float(ref))

    # Secondary check: multi-tile grid with a ragged last pixel tile
    # (HW = 255, tile = 128 -> exercises the in-kernel OOB lane masking).
    H2, W2 = 15, 17
    inputs2 = jax.random.normal(k3, (N, C, H2, W2), dtype=jnp.float32)
    targets2 = jax.random.randint(k4, (N, H2, W2), 0, C + 1, dtype=jnp.int32)
    loss2 = jax.block_until_ready(
        cross_entropy_loss_2d(inputs2, targets2, weight, tile_p=128))
    ref2 = _reference(inputs2, targets2, weight)
    assert jnp.allclose(loss2, ref2, atol=1e-4, rtol=1e-4), (float(loss2), float(ref2))

    print("KERNEL_OK")
</pallas_src>

<mosaic_0001>
module attributes {stable_mosaic.version = 11 : i64} {
  func.func @_weighted_ce_kernel(%arg0: i32, %arg1: i32, %arg2: memref<1x37x256xf32, #tpu.memory_space<vmem>>, %arg3: memref<1x1x256xi32, #tpu.memory_space<vmem>>, %arg4: memref<1x1x256xf32, #tpu.memory_space<vmem>>, %arg5: memref<1x1x1x1xf32, #tpu.memory_space<vmem>>, %arg6: memref<1x1x1x1xf32, #tpu.memory_space<vmem>>) attributes {dimension_semantics = [#tpu.dimension_semantics<parallel>, #tpu.dimension_semantics<parallel>], iteration_bounds = array<i64: 2, 1>, scalar_prefetch = 0 : i64, scratch_operands = 0 : i64, tpu.core_type = #tpu.core_type<tc>, window_params = [{transform_indices = @transform_0, window_bounds = array<i64: 1, 37, 256>}, {transform_indices = @transform_1, window_bounds = array<i64: 1, 1, 256>}, {transform_indices = @transform_2, window_bounds = array<i64: 1, 1, 256>}, {transform_indices = @transform_3, window_bounds = array<i64: 1, 1, 1, 1>}, {transform_indices = @transform_4, window_bounds = array<i64: 1, 1, 1, 1>}]} {
    %c0 = arith.constant 0 : index
    %c0_0 = arith.constant 0 : index
    %c0_1 = arith.constant 0 : index
    %0 = vector.load %arg2[%c0, %c0_0, %c0_1] : memref<1x37x256xf32, #tpu.memory_space<vmem>>, vector<1x37x256xf32>
    %1 = vector.shape_cast %0 : vector<1x37x256xf32> to vector<37x256xf32>
    %c0_2 = arith.constant 0 : index
    %c0_3 = arith.constant 0 : index
    %c0_4 = arith.constant 0 : index
    %2 = vector.load %arg3[%c0_2, %c0_3, %c0_4] : memref<1x1x256xi32, #tpu.memory_space<vmem>>, vector<1x1x256xi32>
    %3 = vector.shape_cast %2 : vector<1x1x256xi32> to vector<1x256xi32>
    %c0_5 = arith.constant 0 : index
    %c0_6 = arith.constant 0 : index
    %c0_7 = arith.constant 0 : index
    %4 = vector.load %arg4[%c0_5, %c0_6, %c0_7] : memref<1x1x256xf32, #tpu.memory_space<vmem>>, vector<1x1x256xf32>
    %5 = vector.shape_cast %4 : vector<1x1x256xf32> to vector<1x256xf32>
    %cst = arith.constant dense<0xFF800000> : vector<256xf32>
    %6 = vector.multi_reduction <maximumf>, %1, %cst [0] : vector<37x256xf32> to vector<256xf32>
    %7 = vector.shape_cast %6 : vector<256xf32> to vector<1x256xf32>
    %8 = vector.broadcast %7 : vector<1x256xf32> to vector<37x256xf32>
    %9 = arith.subf %1, %8 : vector<37x256xf32>
    %10 = math.exp %9 : vector<37x256xf32>
    %cst_8 = arith.constant dense<0.000000e+00> : vector<256xf32>
    %11 = vector.multi_reduction <add>, %10, %cst_8 [0] : vector<37x256xf32> to vector<256xf32>
    %12 = vector.shape_cast %11 : vector<256xf32> to vector<1x256xf32>
    %13 = math.log %12 : vector<1x256xf32>
    %14 = arith.addf %13, %7 : vector<1x256xf32>
    %15 = tpu.iota {dimensions = array<i32: 0>} : vector<37x256xi32>
    %c1_i32 = arith.constant 1 : i32
    %16 = vector.broadcast %c1_i32 : i32 to vector<1x256xi32>
    %17 = arith.subi %3, %16 : vector<1x256xi32>
    %18 = vector.broadcast %17 : vector<1x256xi32> to vector<37x256xi32>
    %19 = arith.cmpi eq, %15, %18 : vector<37x256xi32>
    %cst_9 = arith.constant 0.000000e+00 : f32
    %20 = vector.broadcast %cst_9 : f32 to vector<37x256xf32>
    %21 = arith.select %19, %1, %20 : vector<37x256xi1>, vector<37x256xf32>
    %cst_10 = arith.constant dense<0.000000e+00> : vector<256xf32>
    %22 = vector.multi_reduction <add>, %21, %cst_10 [0] : vector<37x256xf32> to vector<256xf32>
    %23 = vector.shape_cast %22 : vector<256xf32> to vector<1x256xf32>
    %24 = arith.subf %14, %23 : vector<1x256xf32>
    %25 = arith.mulf %5, %24 : vector<1x256xf32>
    %c0_i32 = arith.constant 0 : i32
    %26 = vector.broadcast %c0_i32 : i32 to vector<1x256xi32>
    %27 = arith.cmpi sgt, %3, %26 : vector<1x256xi32>
    %28 = arith.extui %27 : vector<1x256xi1> to vector<1x256xi32>
    %29 = arith.sitofp %28 : vector<1x256xi32> to vector<1x256xf32>
    %cst_11 = arith.constant dense<0.000000e+00> : vector<1xf32>
    %30 = vector.multi_reduction <add>, %25, %cst_11 [1] : vector<1x256xf32> to vector<1xf32>
    %31 = vector.shape_cast %30 : vector<1xf32> to vector<1x1xf32>
    %c0_12 = arith.constant 0 : index
    %c0_13 = arith.constant 0 : index
    %c0_14 = arith.constant 0 : index
    %c0_15 = arith.constant 0 : index
    %32 = vector.load %arg5[%c0_12, %c0_13, %c0_14, %c0_15] : memref<1x1x1x1xf32, #tpu.memory_space<vmem>>, vector<1x1x1x1xf32>
    %33 = vector.shape_cast %32 : vector<1x1x1x1xf32> to vector<1x1xf32>
    %34 = vector.shape_cast %31 : vector<1x1xf32> to vector<1x1x1x1xf32>
    tpu.vector_store %arg5[%c0_12, %c0_13, %c0_14, %c0_15], %34 {strides = array<i32>} : memref<1x1x1x1xf32, #tpu.memory_space<vmem>>, vector<1x1x1x1xf32>,
    %cst_16 = arith.constant dense<0.000000e+00> : vector<1xf32>
    %35 = vector.multi_reduction <add>, %29, %cst_16 [1] : vector<1x256xf32> to vector<1xf32>
    %36 = vector.shape_cast %35 : vector<1xf32> to vector<1x1xf32>
    %c0_17 = arith.constant 0 : index
    %c0_18 = arith.constant 0 : index
    %c0_19 = arith.constant 0 : index
    %c0_20 = arith.constant 0 : index
    %37 = vector.load %arg6[%c0_17, %c0_18, %c0_19, %c0_20] : memref<1x1x1x1xf32, #tpu.memory_space<vmem>>, vector<1x1x1x1xf32>
    %38 = vector.shape_cast %37 : vector<1x1x1x1xf32> to vector<1x1xf32>
    %39 = vector.shape_cast %36 : vector<1x1xf32> to vector<1x1x1x1xf32>
    tpu.vector_store %arg6[%c0_17, %c0_18, %c0_19, %c0_20], %39 {strides = array<i32>} : memref<1x1x1x1xf32, #tpu.memory_space<vmem>>, vector<1x1x1x1xf32>,
    return
  }
  func.func @transform_0(%arg0: i32, %arg1: i32) -> (i32, i32, i32) {
    %c0_i32 = arith.constant 0 : i32
    %c0_i32_0 = arith.constant 0 : i32
    return %arg0, %c0_i32, %arg1 : i32, i32, i32
  }
  func.func @transform_1(%arg0: i32, %arg1: i32) -> (i32, i32, i32) {
    %c0_i32 = arith.constant 0 : i32
    %c0_i32_0 = arith.constant 0 : i32
    return %arg0, %c0_i32, %arg1 : i32, i32, i32
  }
  func.func @transform_2(%arg0: i32, %arg1: i32) -> (i32, i32, i32) {
    %c0_i32 = arith.constant 0 : i32
    %c0_i32_0 = arith.constant 0 : i32
    return %arg0, %c0_i32, %arg1 : i32, i32, i32
  }
  func.func @transform_3(%arg0: i32, %arg1: i32) -> (i32, i32, i32, i32) {
    %c0_i32 = arith.constant 0 : i32
    %c0_i32_0 = arith.constant 0 : i32
    %c0_i32_1 = arith.constant 0 : i32
    return %arg0, %arg1, %c0_i32, %c0_i32_0 : i32, i32, i32, i32
  }
  func.func @transform_4(%arg0: i32, %arg1: i32) -> (i32, i32, i32, i32) {
    %c0_i32 = arith.constant 0 : i32
    %c0_i32_0 = arith.constant 0 : i32
    %c0_i32_1 = arith.constant 0 : i32
    return %arg0, %arg1, %c0_i32, %c0_i32_0 : i32, i32, i32, i32
  }
}

</mosaic_0001>

<llo_original>
// kernel: tpu_custom_call.1
$region0: #{tpu_custom_call.1}
  #allocation0 [shape = 'u32[]', space=smem, size = 0x4, offset = 0x4, fixed_abs, tag = 'smem constant byte address 0x4 - core index']
  #allocation1 [shape = 'u32[144,128]{1,0:T(1,128)}', space=vmem, size = 0x12000, scoped, tag = 'internal scratch']
  %s0 = inlined_call_operand.vmem [shape: f32[2,37,256], index: 0, kind: input, shape index: {}]
  %s1 = inlined_call_operand.vmem [shape: s32[2,1,256], index: 1, kind: input, shape index: {}]
  %s2 = inlined_call_operand.vmem [shape: f32[2,1,256], index: 2, kind: input, shape index: {}]
  %s3 = inlined_call_operand.vmem [shape: f32[2,1,1,1], index: 3, kind: output, shape index: {0}]
  %s4 = inlined_call_operand.vmem [shape: f32[2,1,1,1], index: 4, kind: output, shape index: {1}]
  %5 = xla_tuple %s3, %s4
  %s6 = sld [smem:[#allocation0]]
  $region53: #{tpu_custom_call.1} parent=0
    _
  %s8 = ssub.s32 1, %s6
  %s9 = scalar_select 0, %s8, %s6
  loop: start=0, step=1, limit=4
  $region2: #{tpu_custom_call.1} parent=0 // loop_pre_header
    _
  $region3: #{tpu_custom_call.1} parent=0 // loop_header
    %s11 = sphi 0, %s15
    %p12 = scmp.ge.s32.totalorder %s11, 4
    %s18 = sphi 0, %s30
    %s19 = sphi 0, %s26
    %s20 = sphi 0, %s18
    %s21 = sphi 0, %s19
    %s22 = sphi 0, %s20
    %s23 = sphi 0, %s21
    %s35 = sphi 0, %s37
    %s38 = sphi 0, %s35
    %s39 = sphi 0, %s38
    %s55 = sphi 0, %s39
    %s63 = sphi 0, %s65
    %s66 = sphi 0, %s63
    %s67 = sphi 0, %s66
    %s83 = sphi 0, %s67
    %s91 = sphi 0, %s93
    %s94 = sphi 0, %s91
    %s95 = sphi 0, %s94
    %s111 = sphi 0, %s95
    %s119 = sphi 0, %s121
    %s122 = sphi 0, %s119
    %s123 = sphi 0, %s122
    %s139 = sphi 0, %s123
    %s147 = sphi 0, %s149
    %s150 = sphi 0, %s147
    %s151 = sphi 0, %s150
    %s167 = sphi 0, %s151
  $region4: #{tpu_custom_call.1} parent=0 // loop_header_branch
    %14 = sbr.rel (%p12) target = $region8
  $region5: #{tpu_custom_call.1} parent=0 // loop_body
    %s16 = ssub.s32 %s11, 1
    %s17 = ssub.s32 %s11, 2
    %s24 = sadd.s32 1, %s19
    %p25 = scmp.ge.s32.totalorder %s24, 1
    %s26 = scalar_select %p25, 0, %s24
    %s27 = sadd.s32 1, %s18
    %s28 = scalar_select %p25, %s27, %s18
    %p29 = scmp.ge.s32.totalorder %s28, 2
    %s30 = scalar_select %p29, 0, %s28
    %s31 = ssub.s32 %s18, %s30
    %s32 = ssub.s32 %s19, %s26
    %s33 = sor.u32 %s31, %s32
    %p34 = scmp.eq.s32.totalorder %s33, 0
    %s36 = sadd.s32 %s35, 1
    %s37 = scalar_select %p34, %s35, %s36
    %p40 = pneg %p34
    %p41 = scmp.eq.s32.totalorder %s11, 1
    %p42 = por %p40, %p41
    %p43 = scmp.ne.s32.totalorder %s35, %s38
    %p44 = scmp.eq.s32.totalorder %s11, 0
    %p45 = por %p43, %p44
    %p46 = scmp.ne.s32.totalorder %s35, %s38
    %p47 = scmp.eq.s32.totalorder %s16, 1
    %p48 = por %p46, %p47
    %p49 = scmp.ne.s32.totalorder %s38, %s39
    %p50 = scmp.eq.s32.totalorder %s16, 0
    %p51 = por %p49, %p50
    %p52 = scmp.ne.s32.totalorder %s38, %s39
    %p53 = scmp.eq.s32.totalorder %s17, 1
    %p54 = por %p52, %p53
    %p56 = scmp.ne.s32.totalorder %s39, %s55
    %p57 = scmp.eq.s32.totalorder %s17, 0
    %p58 = por %p56, %p57
    %s59 = ssub.s32 %s18, %s30
    %s60 = ssub.s32 %s19, %s26
    %s61 = sor.u32 %s59, %s60
    %p62 = scmp.eq.s32.totalorder %s61, 0
    %s64 = sadd.s32 %s63, 1
    %s65 = scalar_select %p62, %s63, %s64
    %p68 = pneg %p62
    %p69 = scmp.eq.s32.totalorder %s11, 1
    %p70 = por %p68, %p69
    %p71 = scmp.ne.s32.totalorder %s63, %s66
    %p72 = scmp.eq.s32.totalorder %s11, 0
    %p73 = por %p71, %p72
    %p74 = scmp.ne.s32.totalorder %s63, %s66
    %p75 = scmp.eq.s32.totalorder %s16, 1
    %p76 = por %p74, %p75
    %p77 = scmp.ne.s32.totalorder %s66, %s67
    %p78 = scmp.eq.s32.totalorder %s16, 0
    %p79 = por %p77, %p78
    %p80 = scmp.ne.s32.totalorder %s66, %s67
    %p81 = scmp.eq.s32.totalorder %s17, 1
    %p82 = por %p80, %p81
    %p84 = scmp.ne.s32.totalorder %s67, %s83
    %p85 = scmp.eq.s32.totalorder %s17, 0
    %p86 = por %p84, %p85
    %s87 = ssub.s32 %s18, %s30
    %s88 = ssub.s32 %s19, %s26
    %s89 = sor.u32 %s87, %s88
    %p90 = scmp.eq.s32.totalorder %s89, 0
    %s92 = sadd.s32 %s91, 1
    %s93 = scalar_select %p90, %s91, %s92
    %p96 = pneg %p90
    %p97 = scmp.eq.s32.totalorder %s11, 1
    %p98 = por %p96, %p97
    %p99 = scmp.ne.s32.totalorder %s91, %s94
    %p100 = scmp.eq.s32.totalorder %s11, 0
    %p101 = por %p99, %p100
    %p102 = scmp.ne.s32.totalorder %s91, %s94
    %p103 = scmp.eq.s32.totalorder %s16, 1
    %p104 = por %p102, %p103
    %p105 = scmp.ne.s32.totalorder %s94, %s95
    %p106 = scmp.eq.s32.totalorder %s16, 0
    %p107 = por %p105, %p106
    %p108 = scmp.ne.s32.totalorder %s94, %s95
    %p109 = scmp.eq.s32.totalorder %s17, 1
    %p110 = por %p108, %p109
    %p112 = scmp.ne.s32.totalorder %s95, %s111
    %p113 = scmp.eq.s32.totalorder %s17, 0
    %p114 = por %p112, %p113
    %s115 = ssub.s32 %s18, %s30
    %s116 = ssub.s32 %s19, %s26
    %s117 = sor.u32 %s115, %s116
    %p118 = scmp.eq.s32.totalorder %s117, 0
    %s120 = sadd.s32 %s119, 1
    %s121 = scalar_select %p118, %s119, %s120
    %p124 = pneg %p118
    %p125 = scmp.eq.s32.totalorder %s11, 1
    %p126 = por %p124, %p125
    %p127 = scmp.ne.s32.totalorder %s119, %s122
    %p128 = scmp.eq.s32.totalorder %s11, 0
    %p129 = por %p127, %p128
    %p130 = scmp.ne.s32.totalorder %s119, %s122
    %p131 = scmp.eq.s32.totalorder %s16, 1
    %p132 = por %p130, %p131
    %p133 = scmp.ne.s32.totalorder %s122, %s123
    %p134 = scmp.eq.s32.totalorder %s16, 0
    %p135 = por %p133, %p134
    %p136 = scmp.ne.s32.totalorder %s122, %s123
    %p137 = scmp.eq.s32.totalorder %s17, 1
    %p138 = por %p136, %p137
    %p140 = scmp.ne.s32.totalorder %s123, %s139
    %p141 = scmp.eq.s32.totalorder %s17, 0
    %p142 = por %p140, %p141
    %s143 = ssub.s32 %s18, %s30
    %s144 = ssub.s32 %s19, %s26
    %s145 = sor.u32 %s143, %s144
    %p146 = scmp.eq.s32.totalorder %s145, 0
    %s148 = sadd.s32 %s147, 1
    %s149 = scalar_select %p146, %s147, %s148
    %p152 = pneg %p146
    %p153 = scmp.eq.s32.totalorder %s11, 1
    %p154 = por %p152, %p153
    %p155 = scmp.ne.s32.totalorder %s147, %s150
    %p156 = scmp.eq.s32.totalorder %s11, 0
    %p157 = por %p155, %p156
    %p158 = scmp.ne.s32.totalorder %s147, %s150
    %p159 = scmp.eq.s32.totalorder %s16, 1
    %p160 = por %p158, %p159
    %p161 = scmp.ne.s32.totalorder %s150, %s151
    %p162 = scmp.eq.s32.totalorder %s16, 0
    %p163 = por %p161, %p162
    %p164 = scmp.ne.s32.totalorder %s150, %s151
    %p165 = scmp.eq.s32.totalorder %s17, 1
    %p166 = por %p164, %p165
    %p168 = scmp.ne.s32.totalorder %s151, %s167
    %p169 = scmp.eq.s32.totalorder %s17, 0
    %p170 = por %p168, %p169
    %p171 = scmp.le.s32.totalorder 1, %s11
    %p172 = scmp.lt.s32.totalorder %s11, 3
    %p173 = pnand %p171, %p172
    %p174 = pneg %p173
    // Predicated region
    $region9: #{tpu_custom_call.1} parent=5 // pred_check
      _
    $region10: #{tpu_custom_call.1} parent=5 // pred_check_branch
      %176 = sbr.rel (%p173) target = $region12
    $region11: #{tpu_custom_call.1} parent=5 // pred_region
      %s177 = ssub.s32 %s11, 1
    $region12: #{tpu_custom_call.1} parent=5 // pred_fallthru
      _
    %p178 = scmp.lt.s32.totalorder %s11, 2
    // Predicated region
    $region13: #{tpu_custom_call.1} parent=5 // pred_check
      %p179 = pneg %p178
    $region14: #{tpu_custom_call.1} parent=5 // pred_check_branch
      %181 = sbr.rel (%p179) target = $region16
    $region15: #{tpu_custom_call.1} parent=5 // pred_region
      // Predicated region
      $region17: #{tpu_custom_call.1} parent=15 // pred_check
        %p182 = pneg %p45
      $region18: #{tpu_custom_call.1} parent=15 // pred_check_branch
        %184 = sbr.rel (%p182) target = $region20
      $region19: #{tpu_custom_call.1} parent=15 // pred_region
        %s185 = smul.u32 2, %s19
        %p186 = scmp.lt.s32.totalorder %s18, 1
        %s187 = scalar_select %p186, %s18, 1
        %p188 = scmp.lt.s32.totalorder %s185, 1
        %s189 = scalar_select %p188, %s185, 1
        %s190 = smul.addr %s187, 10
        %s191 = sadd.s32 %s189, %s190
        %s192 = smul.addr %s191, 8
        %s193 = scalar_lea.vmem %s0, %s192
        %s194 = smul.u32 2, %s19
      $region20: #{tpu_custom_call.1} parent=15 // pred_fallthru
        _
      // Predicated region
      $region21: #{tpu_custom_call.1} parent=15 // pred_check
        %p195 = pneg %p73
      $region22: #{tpu_custom_call.1} parent=15 // pred_check_branch
        %197 = sbr.rel (%p195) target = $region24
      $region23: #{tpu_custom_call.1} parent=15 // pred_region
        %s198 = smul.u32 2, %s19
        %p199 = scmp.lt.s32.totalorder %s18, 1
        %s200 = scalar_select %p199, %s18, 1
        %p201 = scmp.lt.s32.totalorder %s198, 1
        %s202 = scalar_select %p201, %s198, 1
        %s203 = smul.addr %s200, 2
        %s204 = sadd.s32 %s202, %s203
        %s205 = scalar_lea.vmem %s1, %s204
        %s206 = smul.u32 2, %s19
      $region24: #{tpu_custom_call.1} parent=15 // pred_fallthru
        _
      // Predicated region
      $region25: #{tpu_custom_call.1} parent=15 // pred_check
        %p207 = pneg %p101
      $region26: #{tpu_custom_call.1} parent=15 // pred_check_branch
        %209 = sbr.rel (%p207) target = $region28
      $region27: #{tpu_custom_call.1} parent=15 // pred_region
        %s210 = smul.u32 2, %s19
        %p211 = scmp.lt.s32.totalorder %s18, 1
        %s212 = scalar_select %p211, %s18, 1
        %p213 = scmp.lt.s32.totalorder %s210, 1
        %s214 = scalar_select %p213, %s210, 1
        %s215 = smul.addr %s212, 2
        %s216 = sadd.s32 %s214, %s215
        %s217 = scalar_lea.vmem %s2, %s216
        %s218 = smul.u32 2, %s19
      $region28: #{tpu_custom_call.1} parent=15 // pred_fallthru
        _
    $region16: #{tpu_custom_call.1} parent=5 // pred_fallthru
      _
    %p219 = scmp.le.s32.totalorder 1, %s11
    %p220 = scmp.lt.s32.totalorder %s11, 3
    %p221 = pnand %p219, %p220
    %p222 = pneg %p221
    // Predicated region
    $region29: #{tpu_custom_call.1} parent=5 // pred_check
      _
    $region30: #{tpu_custom_call.1} parent=5 // pred_check_branch
      %224 = sbr.rel (%p221) target = $region32
    $region31: #{tpu_custom_call.1} parent=5 // pred_region
      %s225 = ssub.s32 %s11, 1
      %s226 = smul.u32 2, %s21
      %p227 = scmp.lt.s32.totalorder %s20, 1
      %s228 = scalar_select %p227, %s20, 1
      %p229 = scmp.lt.s32.totalorder %s226, 1
      %s230 = scalar_select %p229, %s226, 1
      %s231 = smul.addr %s228, 10
      %s232 = sadd.s32 %s230, %s231
      %s233 = smul.addr %s232, 8
      %s234 = scalar_lea.vmem %s0, %s233
      %p235 = pneg %p51
      %p236 = pneg %p48
      %s237 = smul.u32 2, %s21
      %p238 = scmp.lt.s32.totalorder %s20, 1
      %s239 = scalar_select %p238, %s20, 1
      %p240 = scmp.lt.s32.totalorder %s237, 1
      %s241 = scalar_select %p240, %s237, 1
      %s242 = smul.addr %s239, 2
      %s243 = sadd.s32 %s241, %s242
      %s244 = scalar_lea.vmem %s1, %s243
      %p245 = pneg %p79
      %p246 = pneg %p76
      %s247 = smul.u32 2, %s21
      %p248 = scmp.lt.s32.totalorder %s20, 1
      %s249 = scalar_select %p248, %s20, 1
      %p250 = scmp.lt.s32.totalorder %s247, 1
      %s251 = scalar_select %p250, %s247, 1
      %s252 = smul.addr %s249, 2
      %s253 = sadd.s32 %s251, %s252
      %s254 = scalar_lea.vmem %s2, %s253
      %p255 = pneg %p107
      %p256 = pneg %p104
      %p257 = pneg %p135
      %p258 = pneg %p132
      %p259 = scmp.lt.s32.totalorder %s20, 1
      %s260 = scalar_select %p259, %s20, 1
      %p261 = scmp.lt.s32.totalorder %s21, 0
      %s262 = scalar_select %p261, %s21, 0
      %s263 = sadd.s32 %s262, %s260
      %s264 = scalar_lea.vmem %s3, %s263
      %p265 = pneg %p163
      %p266 = pneg %p160
      %p267 = scmp.lt.s32.totalorder %s20, 1
      %s268 = scalar_select %p267, %s20, 1
      %p269 = scmp.lt.s32.totalorder %s21, 0
      %s270 = scalar_select %p269, %s21, 0
      %s271 = sadd.s32 %s270, %s268
      %s272 = scalar_lea.vmem %s4, %s271
      %s273 = smul.u32 2, %s21
      %p274 = scmp.lt.s32.totalorder %s20, 1
      %s275 = scalar_select %p274, %s20, 1
      %p276 = scmp.lt.s32.totalorder %s273, 1
      %s277 = scalar_select %p276, %s273, 1
      %s278 = smul.addr %s275, 10
      %s279 = sadd.s32 %s277, %s278
      %s280 = smul.addr %s279, 8
      %s281 = scalar_lea.vmem %s0, %s280
      %s282 = smul.u32 2, %s21
      %s283 = smul.u32 2, %s21
      %p284 = scmp.lt.s32.totalorder %s20, 1
      %s285 = scalar_select %p284, %s20, 1
      %p286 = scmp.lt.s32.totalorder %s283, 1
      %s287 = scalar_select %p286, %s283, 1
      %s288 = smul.addr %s285, 2
      %s289 = sadd.s32 %s287, %s288
      %s290 = scalar_lea.vmem %s1, %s289
      %s291 = smul.u32 2, %s21
      %s292 = smul.u32 2, %s21
      %p293 = scmp.lt.s32.totalorder %s20, 1
      %s294 = scalar_select %p293, %s20, 1
      %p295 = scmp.lt.s32.totalorder %s292, 1
      %s296 = scalar_select %p295, %s292, 1
      %s297 = smul.addr %s294, 2
      %s298 = sadd.s32 %s296, %s297
      %s299 = scalar_lea.vmem %s2, %s298
      %s300 = smul.u32 2, %s21
      %p301 = scmp.lt.s32.totalorder %s20, 1
      %s302 = scalar_select %p301, %s20, 1
      %p303 = scmp.lt.s32.totalorder %s21, 0
      %s304 = scalar_select %p303, %s21, 0
      %s305 = sadd.s32 %s304, %s302
      %s306 = scalar_lea.vmem %s3, %s305
      %p307 = scmp.lt.s32.totalorder %s20, 1
      %s308 = scalar_select %p307, %s20, 1
      %p309 = scmp.lt.s32.totalorder %s21, 0
      %s310 = scalar_select %p309, %s21, 0
      %s311 = sadd.s32 %s310, %s308
      %s312 = scalar_lea.vmem %s4, %s311
      %v313 = vld [vmem:[%s281] sm:$0xff]
      %v314 = vld [vmem:[%s281 + $0x8] sm:$0xff]
      %v315 = vld [vmem:[%s281 + $0x10] sm:$0xff]
      %v316 = vld [vmem:[%s281 + $0x18] sm:$0xff]
      %v317 = vld [vmem:[%s281 + $0x20] sm:$0xff]
      %v318 = vld [vmem:[%s281 + $0x28] sm:$0xff]
      %v319 = vld [vmem:[%s281 + $0x30] sm:$0xff]
      %v320 = vld [vmem:[%s281 + $0x38] sm:$0xff]
      %v321 = vld [vmem:[%s281 + $0x40] sm:$0x1f]
      %v322 = vld [vmem:[%s281 + $0x48] sm:$0x1f]
      %v323 = vld [vmem:[%s290] sm:$0x3]
      %v324 = vld [vmem:[%s299] sm:$0x3]
      %v325 = vmax.f32 %v313, %v317
      %v326 = vmax.f32 %v315, %v319
      %vm327 = vcmask 1044480
      %v328 = vsel %vm327, %v321, -inf
      %v329 = vmax.f32 %v325, %v328
      %v330 = vmax.f32 %v329, %v326
      %v331 = vrot.slane %v330, 4
      %v332 = vmax.f32 %v330, %v331
      %v333 = vrot.slane %v332, 2
      %v334 = vmax.f32 %v332, %v333
      %v335 = vrot.slane %v334, 1
      %v336 = vmax.f32 %v334, %v335
      %v337 = vmax.f32 %v314, %v318
      %v338 = vmax.f32 %v316, %v320
      %v339 = vsel %vm327, %v322, -inf
      %v340 = vmax.f32 %v337, %v339
      %v341 = vmax.f32 %v340, %v338
      %v342 = vrot.slane %v341, 4
      %v343 = vmax.f32 %v341, %v342
      %v344 = vrot.slane %v343, 2
      %v345 = vmax.f32 %v343, %v344
      %v346 = vrot.slane %v345, 1
      %v347 = vmax.f32 %v345, %v346
      %v348 = vsub.f32 %v313, %v336
      %v349 = vsub.f32 %v314, %v347
      %v350 = vsub.f32 %v315, %v336
      %v351 = vsub.f32 %v316, %v347
      %v352 = vsub.f32 %v317, %v336
      %v353 = vsub.f32 %v318, %v347
      %v354 = vsub.f32 %v319, %v336
      %v355 = vsub.f32 %v320, %v347
      %v356 = vsub.f32 %v321, %v336
      %v357 = vsub.f32 %v322, %v347
      %v358 = vmul.f32 %v348, 1.442695
      %v359 = vpow.pop %v358
      %v360 = vmul.f32 %v349, 1.442695
      %v361 = vpow.pop %v360
      %v362 = vmul.f32 %v350, 1.442695
      %v363 = vpow.pop %v362
      %v364 = vmul.f32 %v351, 1.442695
      %v365 = vpow.pop %v364
      %v366 = vmul.f32 %v352, 1.442695
      %v367 = vpow.pop %v366
      %v368 = vmul.f32 %v353, 1.442695
      %v369 = vpow.pop %v368
      %v370 = vmul.f32 %v354, 1.442695
      %v371 = vpow.pop %v370
      %v372 = vmul.f32 %v355, 1.442695
      %v373 = vpow.pop %v372
      %v374 = vmul.f32 %v356, 1.442695
      %v375 = vpow.pop %v374
      %v376 = vmul.f32 %v357, 1.442695
      %v377 = vpow.pop %v376
      %v378 = vadd.f32 %v359, %v363
      %v379 = vadd.f32 %v378, %v367
      %v380 = vadd.f32 %v379, %v371
      %v381 = vsel %vm327, %v375, 0.0
      %v382 = vadd.f32 %v380, %v381
      %v383 = vrot.slane %v382, 4
      %v384 = vadd.f32 %v382, %v383
      %v385 = vrot.slane %v384, 2
      %v386 = vadd.f32 %v384, %v385
      %v387 = vrot.slane %v386, 1
      %v388 = vadd.f32 %v386, %v387
      %v389 = vadd.f32 %v361, %v365
      %v390 = vadd.f32 %v389, %v369
      %v391 = vadd.f32 %v390, %v373
      %v392 = vsel %vm327, %v377, 0.0
      %v393 = vadd.f32 %v391, %v392
      %v394 = vrot.slane %v393, 4
      %v395 = vadd.f32 %v393, %v394
      %v396 = vrot.slane %v395, 2
      %v397 = vadd.f32 %v395, %v396
      %v398 = vrot.slane %v397, 1
      %v399 = vadd.f32 %v397, %v398
      %v400 = vlog2.pop %v388
      %v401 = vmul.f32 %v400, 0.6931472
      %v402 = vlog2.pop %v399
      %v403 = vmul.f32 %v402, 0.6931472
      %v404 = vadd.f32 %v401, %v336
      %v405 = vadd.f32 %v403, %v347
      %v406 = vlaneseq
      %v407 = vshrl.u32 %v406, 7
      %v408 = vadd.s32 %v407, 8
      %v409 = vadd.s32 %v407, 16
      %v410 = vadd.s32 %v407, 24
      %v411 = vadd.s32 %v407, 32
      %v412 = vsub.s32 %v323, 1
      %v413 = vlaneseq
      %v414 = vshrl.u32 %v413, 7
      %v415 = vsub.s32 0, %v414
      %v416 = vrot.slane %v412, %v415
      %v417 = vlaneseq
      %v418 = vshrl.u32 %v417, 7
      %v419 = vsub.s32 1, %v418
      %v420 = vrot.slane %v412, %v419
      %vm421 = vcmp.eq.s32.totalorder %v407, %v416
      %vm422 = vcmp.eq.s32.totalorder %v407, %v420
      %vm423 = vcmp.eq.s32.totalorder %v408, %v416
      %vm424 = vcmp.eq.s32.totalorder %v408, %v420
      %vm425 = vcmp.eq.s32.totalorder %v409, %v416
      %vm426 = vcmp.eq.s32.totalorder %v409, %v420
      %vm427 = vcmp.eq.s32.totalorder %v410, %v416
      %vm428 = vcmp.eq.s32.totalorder %v410, %v420
      %vm429 = vcmp.eq.s32.totalorder %v411, %v416
      %vm430 = vcmp.eq.s32.totalorder %v411, %v420
      %v431 = vsel %vm421, %v313, 0.0
      %v432 = vsel %vm422, %v314, 0.0
      %v433 = vsel %vm423, %v315, 0.0
      %v434 = vsel %vm424, %v316, 0.0
      %v435 = vsel %vm425, %v317, 0.0
      %v436 = vsel %vm426, %v318, 0.0
      %v437 = vsel %vm427, %v319, 0.0
      %v438 = vsel %vm428, %v320, 0.0
      %v439 = vsel %vm429, %v321, 0.0
      %v440 = vsel %vm430, %v322, 0.0
      %v441 = vadd.f32 %v431, %v433
      %v442 = vadd.f32 %v441, %v435
      %v443 = vadd.f32 %v442, %v437
      %v444 = vsel %vm327, %v439, 0.0
      %v445 = vadd.f32 %v443, %v444
      %v446 = vrot.slane %v445, 4
      %v447 = vadd.f32 %v445, %v446
      %v448 = vrot.slane %v447, 2
      %v449 = vadd.f32 %v447, %v448
      %v450 = vrot.slane %v449, 1
      %v451 = vadd.f32 %v449, %v450
      %v452 = vadd.f32 %v432, %v434
      %v453 = vadd.f32 %v452, %v436
      %v454 = vadd.f32 %v453, %v438
      %v455 = vsel %vm327, %v440, 0.0
      %v456 = vadd.f32 %v454, %v455
      %v457 = vrot.slane %v456, 4
      %v458 = vadd.f32 %v456, %v457
      %v459 = vrot.slane %v458, 2
      %v460 = vadd.f32 %v458, %v459
      %v461 = vrot.slane %v460, 1
      %v462 = vadd.f32 %v460, %v461
      %v463 = vsub.f32 %v404, %v451
      %v464 = vsub.f32 %v405, %v462
      %v467 = vcombine.low %v463, %v464
      %v469 = vunpack.c.l.s4 1966171168
      %v470 = vunpack.c.0.s8 %v469
      %v471 = vlaneseq
      %v472 = vshrl.u32 %v471, 7
      %v473 = vsub.s32 %v470, %v472
      %v474 = vrot.slane %v467, %v473
      %v476 = vunpack.c.l.s4 1966171168
      %v477 = vunpack.c.0.s8 %v476
      %v478 = vlaneseq
      %v479 = vshrl.u32 %v478, 7
      %v480 = vsub.s32 %v477, %v479
      %v481 = vrot.slane %v474, %v480
      %v483 = vmul.f32 %v324, %v481
      %vm484 = vcmp.gt.s32.totalorder %v323, 0
      %v485 = vsel %vm484, 1, 0
      %v486 = vcvt.s32.f32 %v485
      %v488 = vlaneseq
      %v489 = vshrl.u32 %v488, 7
      %v490 = vsub.s32 0, %v489
      %v491 = vrot.slane %v483, %v490
      %v492 = vlaneseq
      %v493 = vshrl.u32 %v492, 7
      %v494 = vsub.s32 1, %v493
      %v495 = vrot.slane %v483, %v494
      %vm498 = vcmask 1040384
      %v499 = vsel %vm498, %v491, 0.0
      %v500 = vsel %vm498, %v495, 0.0
      %v501 = vadd.f32 %v499, %v500
      %502 = vadd.xlane.f32.xlu0 %v501
      %v503 = vpop.xlane.xlu0 %502
      %vm504 = vcmask 0
      %505 = vst.msk [vmem:[%s306] sm:$0x1] %vm504, %v503
      %v507 = vlaneseq
      %v508 = vshrl.u32 %v507, 7
      %v509 = vsub.s32 0, %v508
      %v510 = vrot.slane %v486, %v509
      %v511 = vlaneseq
      %v512 = vshrl.u32 %v511, 7
      %v513 = vsub.s32 1, %v512
      %v514 = vrot.slane %v486, %v513
      %v517 = vsel %vm498, %v510, 0.0
      %v518 = vsel %vm498, %v514, 0.0
      %v519 = vadd.f32 %v517, %v518
      %520 = vadd.xlane.f32.xlu0 %v519
      %v521 = vpop.xlane.xlu0 %520
      %522 = vst.msk [vmem:[%s312] sm:$0x1] %vm504, %v521
      %p523 = scmp.lt.s32.totalorder %s20, 1
      %s524 = scalar_select %p523, %s20, 1
      %p525 = scmp.lt.s32.totalorder %s21, 0
      %s526 = scalar_select %p525, %s21, 0
      %s527 = sadd.s32 %s526, %s524
      %s528 = scalar_lea.vmem %s3, %s527
      %p529 = scmp.lt.s32.totalorder %s20, 1
      %s530 = scalar_select %p529, %s20, 1
      %p531 = scmp.lt.s32.totalorder %s21, 0
      %s532 = scalar_select %p531, %s21, 0
      %s533 = sadd.s32 %s532, %s530
      %s534 = scalar_lea.vmem %s4, %s533
      // Predicated region
      $region33: #{tpu_custom_call.1} parent=31 // pred_check
        %p535 = pneg %p132
      $region34: #{tpu_custom_call.1} parent=31 // pred_check_branch
        %537 = sbr.rel (%p535) target = $region36
      $region35: #{tpu_custom_call.1} parent=31 // pred_region
        _
      $region36: #{tpu_custom_call.1} parent=31 // pred_fallthru
        _
      // Predicated region
      $region37: #{tpu_custom_call.1} parent=31 // pred_check
        %p538 = pneg %p160
      $region38: #{tpu_custom_call.1} parent=31 // pred_check_branch
        %540 = sbr.rel (%p538) target = $region40
      $region39: #{tpu_custom_call.1} parent=31 // pred_region
        _
      $region40: #{tpu_custom_call.1} parent=31 // pred_fallthru
        _
    $region32: #{tpu_custom_call.1} parent=5 // pred_fallthru
      _
    %p541 = scmp.le.s32.totalorder 2, %s11
    // Predicated region
    $region41: #{tpu_custom_call.1} parent=5 // pred_check
      %p542 = pneg %p541
    $region42: #{tpu_custom_call.1} parent=5 // pred_check_branch
      %544 = sbr.rel (%p542) target = $region44
    $region43: #{tpu_custom_call.1} parent=5 // pred_region
      %s545 = ssub.s32 %s11, 2
      // Predicated region
      $region45: #{tpu_custom_call.1} parent=43 // pred_check
        %p546 = pneg %p138
      $region46: #{tpu_custom_call.1} parent=43 // pred_check_branch
        %548 = sbr.rel (%p546) target = $region48
      $region47: #{tpu_custom_call.1} parent=43 // pred_region
        %p549 = scmp.lt.s32.totalorder %s22, 1
        %s550 = scalar_select %p549, %s22, 1
        %p551 = scmp.lt.s32.totalorder %s23, 0
        %s552 = scalar_select %p551, %s23, 0
        %s553 = sadd.s32 %s552, %s550
        %s554 = scalar_lea.vmem %s3, %s553
      $region48: #{tpu_custom_call.1} parent=43 // pred_fallthru
        _
      // Predicated region
      $region49: #{tpu_custom_call.1} parent=43 // pred_check
        %p555 = pneg %p166
      $region50: #{tpu_custom_call.1} parent=43 // pred_check_branch
        %557 = sbr.rel (%p555) target = $region52
      $region51: #{tpu_custom_call.1} parent=43 // pred_region
        %p558 = scmp.lt.s32.totalorder %s22, 1
        %s559 = scalar_select %p558, %s22, 1
        %p560 = scmp.lt.s32.totalorder %s23, 0
        %s561 = scalar_select %p560, %s23, 0
        %s562 = sadd.s32 %s561, %s559
        %s563 = scalar_lea.vmem %s4, %s562
      $region52: #{tpu_custom_call.1} parent=43 // pred_fallthru
        _
    $region44: #{tpu_custom_call.1} parent=5 // pred_fallthru
      _
  $region6: #{tpu_custom_call.1} parent=0 // loop_footer
    %s15 = sadd.s32 1, %s11
  $region7: #{tpu_custom_call.1} parent=0 // loop_footer_branch
    %10 = sbr.rel target = $region3
  $region8: #{tpu_custom_call.1} parent=0 // loop_exit
    _

</llo_original>
